<compile_context>
chip_gen: v7x
topology: tpu7x:2x2x1
jax: 0.10.0
libtpu: 0.0.40
codegen_flags: <defaults>
</compile_context>

<pallas_src>
import jax
import jax.numpy as jnp
import numpy as np
from jax.experimental import pallas as pl
from jax.experimental.pallas import tpu as pltpu

EXPONENT = 5            # DimeNet default envelope exponent
LANES = 128             # TPU vreg lane width
SUBLANES = 8            # TPU vreg sublane count
MAX_TILE_ROWS = 2048    # 2048 x 128 x 4B = 1 MiB per f32 tile


def _int_pow(x, n: int):
    """x**n for static integer n >= 1 via binary exponentiation (VPU multiplies)."""
    assert n >= 1
    result = None
    base = x
    while n > 0:
        if n & 1:
            result = base if result is None else result * base
        if n > 1:
            base = base * base
        n >>= 1
    return result


def make_envelope_kernel(exponent: int):
    p = exponent + 1
    a = -(p + 1) * (p + 2) / 2.0
    b = float(p * (p + 2))
    c = -p * (p + 1) / 2.0

    def envelope_kernel(x_ref, o_ref):
        x = x_ref[...]
        x_pow_p0 = _int_pow(x, p - 1)          # x^(p-1)
        # Horner on the polynomial tail: x^(p-1) * (a + x*(b + c*x))
        poly = x_pow_p0 * (a + x * (b + c * x))
        env = 1.0 / x + poly
        o_ref[...] = jnp.where(x < 1.0, env, jnp.zeros_like(env))

    return envelope_kernel


def envelope(x, exponent: int = EXPONENT, max_tile_rows: int = MAX_TILE_ROWS):
    """Apply the Envelope cutoff elementwise to an arbitrary-shaped array."""
    orig_shape = x.shape
    flat = x.reshape(-1)
    n = flat.shape[0]

    # Rows needed at 128 lanes; pick a sublane-aligned tile no larger than needed.
    rows_needed = pl.cdiv(n, LANES)
    tile_rows = min(max_tile_rows, pl.cdiv(rows_needed, SUBLANES) * SUBLANES)
    rows = pl.cdiv(rows_needed, tile_rows) * tile_rows

    # Pad with 1.0: keeps 1/x finite and the (x < 1) mask zeroes the padding;
    # the padded tail is sliced off below anyway.
    n_pad = rows * LANES
    flat = jnp.pad(flat, (0, n_pad - n), constant_values=1.0)

    x2d = flat.reshape(rows, LANES)            # lane-dense [rows, 128] slab
    grid = (rows // tile_rows,)

    out2d = pl.pallas_call(
        make_envelope_kernel(exponent),
        out_shape=jax.ShapeDtypeStruct((rows, LANES), x.dtype),
        grid_spec=pltpu.PrefetchScalarGridSpec(
            num_scalar_prefetch=0,
            grid=grid,
            in_specs=[pl.BlockSpec((tile_rows, LANES), lambda i: (i, 0))],
            out_specs=pl.BlockSpec((tile_rows, LANES), lambda i: (i, 0)),
        ),
        compiler_params=pltpu.CompilerParams(
            dimension_semantics=("parallel",),
        ),
    )(x2d)

    return out2d.reshape(-1)[:n].reshape(orig_shape)


def reference_envelope(x, exponent: int):
    """Pure-JAX reference reproducing the PyTorch Envelope.forward semantics."""
    p = exponent + 1
    a = -(p + 1) * (p + 2) / 2.0
    b = p * (p + 2)
    c = -p * (p + 1) / 2.0
    x_pow_p0 = x ** (p - 1)
    x_pow_p1 = x_pow_p0 * x
    x_pow_p2 = x_pow_p1 * x
    return (1.0 / x + a * x_pow_p0 + b * x_pow_p1 + c * x_pow_p2) * (x < 1.0).astype(x.dtype)


if __name__ == "__main__":
    key = jax.random.PRNGKey(0)

    # Shape consistent with how Envelope is used in DimeNet: dist.unsqueeze(-1),
    # i.e. [num_edges, 1].  Values span both branches of the (x < 1) cutoff and
    # avoid x == 0 (where the reference itself is inf).
    num_edges = 4096
    x = jax.random.uniform(
        key, (num_edges, 1), minval=0.05, maxval=1.5, dtype=jnp.float32
    )

    out = envelope(x, EXPONENT)
    out = jax.block_until_ready(out)

    ref = reference_envelope(x, EXPONENT)
    np.testing.assert_allclose(np.asarray(out), np.asarray(ref), rtol=1e-5, atol=1e-5)

    print("KERNEL_OK")
</pallas_src>

<mosaic_0001>
module attributes {stable_mosaic.version = 11 : i64} {
  func.func @envelope_kernel(%arg0: i32, %arg1: memref<32x128xf32, #tpu.memory_space<vmem>>, %arg2: memref<32x128xf32, #tpu.memory_space<vmem>>) attributes {dimension_semantics = [#tpu.dimension_semantics<parallel>], iteration_bounds = array<i64: 1>, scalar_prefetch = 0 : i64, scratch_operands = 0 : i64, tpu.core_type = #tpu.core_type<tc>, window_params = [{transform_indices = @transform_0, window_bounds = array<i64: 32, 128>}, {transform_indices = @transform_1, window_bounds = array<i64: 32, 128>}]} {
    %c0 = arith.constant 0 : index
    %c0_0 = arith.constant 0 : index
    %0 = vector.load %arg1[%c0, %c0_0] : memref<32x128xf32, #tpu.memory_space<vmem>>, vector<32x128xf32>
    %1 = arith.mulf %0, %0 : vector<32x128xf32>
    %2 = arith.mulf %1, %1 : vector<32x128xf32>
    %3 = arith.mulf %0, %2 : vector<32x128xf32>
    %cst = arith.constant -2.100000e+01 : f32
    %4 = vector.broadcast %cst : f32 to vector<32x128xf32>
    %5 = arith.mulf %4, %0 : vector<32x128xf32>
    %cst_1 = arith.constant 4.800000e+01 : f32
    %6 = vector.broadcast %cst_1 : f32 to vector<32x128xf32>
    %7 = arith.addf %6, %5 : vector<32x128xf32>
    %8 = arith.mulf %0, %7 : vector<32x128xf32>
    %cst_2 = arith.constant -2.800000e+01 : f32
    %9 = vector.broadcast %cst_2 : f32 to vector<32x128xf32>
    %10 = arith.addf %9, %8 : vector<32x128xf32>
    %11 = arith.mulf %3, %10 : vector<32x128xf32>
    %cst_3 = arith.constant 1.000000e+00 : f32
    %12 = vector.broadcast %cst_3 : f32 to vector<32x128xf32>
    %13 = arith.divf %12, %0 : vector<32x128xf32>
    %14 = arith.addf %13, %11 : vector<32x128xf32>
    %cst_4 = arith.constant 1.000000e+00 : f32
    %15 = vector.broadcast %cst_4 : f32 to vector<32x128xf32>
    %16 = arith.cmpf olt, %0, %15 : vector<32x128xf32>
    %cst_5 = arith.constant 0.000000e+00 : f32
    %17 = vector.broadcast %cst_5 : f32 to vector<32x128xf32>
    %18 = arith.select %16, %14, %17 : vector<32x128xi1>, vector<32x128xf32>
    %c0_6 = arith.constant 0 : index
    %c0_7 = arith.constant 0 : index
    %19 = vector.load %arg2[%c0_6, %c0_7] : memref<32x128xf32, #tpu.memory_space<vmem>>, vector<32x128xf32>
    tpu.vector_store %arg2[%c0_6, %c0_7], %18 {strides = array<i32>} : memref<32x128xf32, #tpu.memory_space<vmem>>, vector<32x128xf32>,
    return
  }
  func.func @transform_0(%arg0: i32) -> (i32, i32) {
    %c0_i32 = arith.constant 0 : i32
    %c0_i32_0 = arith.constant 0 : i32
    return %arg0, %c0_i32 : i32, i32
  }
  func.func @transform_1(%arg0: i32) -> (i32, i32) {
    %c0_i32 = arith.constant 0 : i32
    %c0_i32_0 = arith.constant 0 : i32
    return %arg0, %c0_i32 : i32, i32
  }
}

</mosaic_0001>

<llo_original>
// kernel: tpu_custom_call.1
$region0: #{tpu_custom_call.1}
  #allocation0 [shape = 'u32[]', space=smem, size = 0x4, offset = 0x4, fixed_abs, tag = 'smem constant byte address 0x4 - core index']
  #allocation1 [shape = 'u32[144,128]{1,0:T(1,128)}', space=vmem, size = 0x12000, scoped, tag = 'internal scratch']
  %s0 = inlined_call_operand.hbm [shape: f32[32,128], index: 0, kind: input, shape index: {}]
  %s1 = inlined_call_operand.hbm [shape: f32[32,128], index: 1, kind: output, shape index: {}]
  %s2 = sld [smem:[#allocation0]]
  $region18: #{tpu_custom_call.1} parent=0
    _
  %s4 = ssub.s32 1, %s2
  %s5 = scalar_select 0, %s4, %s2
  $region1: #{tpu_custom_call.1} parent=0
    #allocation2 [shape = 'u8[16384]{0}', space=vmem, size = 0x4000, scoped, tag = 'input window, operand 0, single buffered']
    #allocation3 [shape = 's32[1]{0}', space=sflag, size = 0x4, scoped, tag = 'scoped memory for tpu_custom_call.1']
    #allocation4 [shape = 's32[1]{0}', space=sflag, size = 0x4, scoped, tag = 'scoped memory for tpu_custom_call.1']
    #allocation5 [shape = 'u8[16384]{0}', space=vmem, size = 0x4000, scoped, tag = 'output window, operand 0, single buffered']
    %6 = vsyncpa [#allocation3], 0
    %7 = vsyncpa [#allocation4], 0
    // Predicated region
    $region2: #{tpu_custom_call.1} parent=1 // pred_check
      _
    $region3: #{tpu_custom_call.1} parent=1 // pred_check_branch
      %9 = sbr.rel (0) target = $region5
    $region4: #{tpu_custom_call.1} parent=1 // pred_region
      %s11 = ssub.s32 512, 512
      %12 = vsyncadd [#allocation3], %s11
      %s13 = sshll.u32 [#allocation2], 4
      %s14 = int_to_ptr.vmem [resolvable:$true] %s13
      %19 = dma.hbm_to_vmem [thread:$0]  %s0, 512, %s14, [#allocation3], 128, 128, 8
    $region5: #{tpu_custom_call.1} parent=1 // pred_fallthru
      _
    // Predicated region
    $region6: #{tpu_custom_call.1} parent=1 // pred_check
      _
    $region7: #{tpu_custom_call.1} parent=1 // pred_check_branch
      %21 = sbr.rel (0) target = $region9
    $region8: #{tpu_custom_call.1} parent=1 // pred_region
      %22 = dma.done [#allocation3], 512
    $region9: #{tpu_custom_call.1} parent=1 // pred_fallthru
      _
    %v23 = vld [vmem:[#allocation2] sm:$0xff]
    %v24 = vld [vmem:[#allocation2 + $0x8] sm:$0xff]
    %v25 = vld [vmem:[#allocation2 + $0x10] sm:$0xff]
    %v26 = vld [vmem:[#allocation2 + $0x18] sm:$0xff]
    %v27 = vmul.f32 %v23, %v23
    %v28 = vmul.f32 %v24, %v24
    %v29 = vmul.f32 %v25, %v25
    %v30 = vmul.f32 %v26, %v26
    %v31 = vmul.f32 %v27, %v27
    %v32 = vmul.f32 %v28, %v28
    %v33 = vmul.f32 %v29, %v29
    %v34 = vmul.f32 %v30, %v30
    %v35 = vmul.f32 %v23, %v31
    %v36 = vmul.f32 %v24, %v32
    %v37 = vmul.f32 %v25, %v33
    %v38 = vmul.f32 %v26, %v34
    %v39 = vmul.f32 %v23, -21.0
    %v40 = vmul.f32 %v24, -21.0
    %v41 = vmul.f32 %v25, -21.0
    %v42 = vmul.f32 %v26, -21.0
    %v43 = vadd.f32 %v39, 48.0
    %v44 = vadd.f32 %v40, 48.0
    %v45 = vadd.f32 %v41, 48.0
    %v46 = vadd.f32 %v42, 48.0
    %v47 = vmul.f32 %v23, %v43
    %v48 = vmul.f32 %v24, %v44
    %v49 = vmul.f32 %v25, %v45
    %v50 = vmul.f32 %v26, %v46
    %v51 = vadd.f32 %v47, -28.0
    %v52 = vadd.f32 %v48, -28.0
    %v53 = vadd.f32 %v49, -28.0
    %v54 = vadd.f32 %v50, -28.0
    %v55 = vmul.f32 %v35, %v51
    %v56 = vmul.f32 %v36, %v52
    %v57 = vmul.f32 %v37, %v53
    %v58 = vmul.f32 %v38, %v54
    %v59 = vrcp.pop %v23
    %v60 = vmul.f32 1.0, %v59
    %v61 = vrcp.pop %v24
    %v62 = vmul.f32 1.0, %v61
    %v63 = vrcp.pop %v25
    %v64 = vmul.f32 1.0, %v63
    %v65 = vrcp.pop %v26
    %v66 = vmul.f32 1.0, %v65
    %v67 = vadd.f32 %v60, %v55
    %v68 = vadd.f32 %v62, %v56
    %v69 = vadd.f32 %v64, %v57
    %v70 = vadd.f32 %v66, %v58
    %vm71 = vcmp.lt.f32.partialorder %v23, 1.0
    %vm72 = vcmp.lt.f32.partialorder %v24, 1.0
    %vm73 = vcmp.lt.f32.partialorder %v25, 1.0
    %vm74 = vcmp.lt.f32.partialorder %v26, 1.0
    %v75 = vsel %vm71, %v67, 0.0
    %v76 = vsel %vm72, %v68, 0.0
    %v77 = vsel %vm73, %v69, 0.0
    %v78 = vsel %vm74, %v70, 0.0
    %79 = vst [vmem:[#allocation5] sm:$0xff] %v75
    %80 = vst [vmem:[#allocation5 + $0x8] sm:$0xff] %v76
    %81 = vst [vmem:[#allocation5 + $0x10] sm:$0xff] %v77
    %82 = vst [vmem:[#allocation5 + $0x18] sm:$0xff] %v78
    // Predicated region
    $region10: #{tpu_custom_call.1} parent=1 // pred_check
      _
    $region11: #{tpu_custom_call.1} parent=1 // pred_check_branch
      %84 = sbr.rel (0) target = $region13
    $region12: #{tpu_custom_call.1} parent=1 // pred_region
      %s86 = ssub.s32 512, 512
      %87 = vsyncadd [#allocation4], %s86
      %s88 = sshll.u32 [#allocation5], 4
      %s89 = int_to_ptr.vmem [resolvable:$true] %s88
      %94 = dma.vmem_to_hbm [thread:$0]  %s89, 512, %s1, [#allocation4], 128, 128, 8
    $region13: #{tpu_custom_call.1} parent=1 // pred_fallthru
      _
    // Predicated region
    $region14: #{tpu_custom_call.1} parent=1 // pred_check
      _
    $region15: #{tpu_custom_call.1} parent=1 // pred_check_branch
      %96 = sbr.rel (0) target = $region17
    $region16: #{tpu_custom_call.1} parent=1 // pred_region
      %97 = dma.done [#allocation4], 512
    $region17: #{tpu_custom_call.1} parent=1 // pred_fallthru
      _
    %98 = vsyncpa [#allocation3], 1
    %99 = vsyncpa [#allocation4], 1

</llo_original>
